<compile_context>
chip_gen: v7x
topology: tpu7x:2x2x1
jax: 0.10.0
libtpu: 0.0.40
codegen_flags: <defaults>
</compile_context>

<pallas_src>
import jax
import jax.numpy as jnp
from jax.experimental import pallas as pl
from jax.experimental.pallas import tpu as pltpu

ALPHA = 0.25
GAMMA = 2            # integer power -> lowers to multiplies on the VPU

_SUB = 8
_LANE = 128
_ROW_ALIGN = 16       # satisfies both f32 (8,128) and bf16 (16,128) tiling
_BLOCK_ROWS = 8192    # (8192, 128) f32 = 4 MiB per input block


def _round_up(x, m):
    return ((x + m - 1) // m) * m


def _num_tensorcores():
    # v7x exposes 2 TensorCores behind one device; v5e/v6e have a single TC.
    try:
        kind = jax.devices()[0].device_kind.lower()
    except Exception:
        return 1
    return 2 if "v7" in kind else 1


def _make_kernel(binary_target):
    def kernel(pred_ref, target_ref, loss_acc_ref, cnt_acc_ref):
        @pl.when(pl.program_id(1) == 0)
        def _():
            loss_acc_ref[...] = jnp.zeros_like(loss_acc_ref)
            cnt_acc_ref[...] = jnp.zeros_like(cnt_acc_ref)

        p = pred_ref[...].astype(jnp.float32)
        t = target_ref[...].astype(jnp.float32)

        if binary_target:
            # t in {0, 1}: one log instead of two (EUP), count = sum(t).
            bce = -jnp.maximum(jnp.log(t * p + (1.0 - t) * (1.0 - p)), -100.0)
            pos = t
        else:
            # nn.BCELoss semantics (log terms clamped at -100); also makes the
            # zero padding contribute exactly zero loss.
            log_p = jnp.maximum(jnp.log(p), -100.0)
            log_1mp = jnp.maximum(jnp.log(1.0 - p), -100.0)
            bce = -(t * log_p + (1.0 - t) * log_1mp)
            pos = jnp.where(t > 0.0, 1.0, 0.0)

        expo = (1.0 - p) ** GAMMA * t + p ** GAMMA * (1.0 - t)
        w = ALPHA * t + (1.0 - ALPHA) * (1.0 - t)
        loss = bce * expo * w

        # Fold (block_rows, 128) -> (8, 128): whole-vreg groups, pure VPU adds.
        loss_acc_ref[...] += jnp.sum(
            loss.reshape(-1, _SUB, _LANE), axis=0).reshape(1, _SUB, _LANE)
        cnt_acc_ref[...] += jnp.sum(
            pos.reshape(-1, _SUB, _LANE), axis=0).reshape(1, _SUB, _LANE)

    return kernel


def focal_loss(pred, target, *, binary_target=False):
    """pred: (N, 1, H, W) probabilities in (0,1); target: (N, H, W).

    binary_target=True enables a faster path (bf16 target stream + single-log
    BCE) that is exact only for 0/1 targets; the default matches the PyTorch
    module for arbitrary float targets.  Returns sum(loss) / #(target > 0).
    """
    pred = jnp.squeeze(pred, axis=1)            # (N, H, W)
    p = pred.reshape(-1)
    t = target.reshape(-1)
    if binary_target:
        t = t.astype(jnp.bfloat16)              # exact for 0/1 masks
    n = p.shape[0]

    ncores = _num_tensorcores()
    rows_needed = pl.cdiv(n, _LANE)
    # Biggest block up to the VMEM budget, but never (much) more than the
    # per-core share of the work, to bound padding waste on small inputs.
    block_rows = min(_BLOCK_ROWS,
                     _round_up(pl.cdiv(rows_needed, ncores), _ROW_ALIGN))
    bpc = pl.cdiv(rows_needed, ncores * block_rows)   # blocks per core
    padded_rows = ncores * bpc * block_rows
    n_pad = padded_rows * _LANE

    # Zero-pad up to an exact grid multiple: zero pred / zero target adds
    # exactly zero loss and zero count, so no in-kernel masking is needed.
    if n_pad != n:
        p = jnp.pad(p, (0, n_pad - n))
        t = jnp.pad(t, (0, n_pad - n))
    p2 = p.reshape(padded_rows, _LANE)
    t2 = t.reshape(padded_rows, _LANE)

    in_spec = pl.BlockSpec((block_rows, _LANE), lambda c, i: (c * bpc + i, 0))
    out_spec = pl.BlockSpec((1, _SUB, _LANE), lambda c, i: (c, 0, 0))

    if ncores > 1:
        # Guarantee the 2-TensorCore split on v7x.
        dim_sem = (pltpu.CORE_PARALLEL, pltpu.ARBITRARY)
    else:
        dim_sem = ("arbitrary", "arbitrary")

    loss_parts, cnt_parts = pl.pallas_call(
        _make_kernel(binary_target),
        out_shape=(
            jax.ShapeDtypeStruct((ncores, _SUB, _LANE), jnp.float32),
            jax.ShapeDtypeStruct((ncores, _SUB, _LANE), jnp.float32),
        ),
        grid_spec=pltpu.PrefetchScalarGridSpec(
            num_scalar_prefetch=0,
            grid=(ncores, bpc),
            in_specs=[in_spec, in_spec],
            out_specs=(out_spec, out_spec),
        ),
        compiler_params=pltpu.CompilerParams(
            dimension_semantics=dim_sem,
            vmem_limit_bytes=32 * 1024 * 1024,
        ),
    )(p2, t2)

    # Tiny final cross-lane reduce + divide (inf/NaN when there are no
    # positive targets, matching the reference module's behaviour).
    return jnp.sum(loss_parts) / jnp.sum(cnt_parts)


def _reference(pred, target):
    pred = jnp.squeeze(pred, axis=1)
    t = target.astype(jnp.float32)
    p = pred.astype(jnp.float32)
    normalize_num = jnp.sum(t > 0.0).astype(jnp.float32)
    bce = -(t * jnp.maximum(jnp.log(p), -100.0)
            + (1.0 - t) * jnp.maximum(jnp.log(1.0 - p), -100.0))
    expo = (1.0 - p) ** GAMMA * t + p ** GAMMA * (1.0 - t)
    w = ALPHA * t + (1.0 - ALPHA) * (1.0 - t)
    return jnp.sum(bce * expo * w) / normalize_num


if __name__ == "__main__":
    key = jax.random.PRNGKey(0)
    k1, k2 = jax.random.split(key)
    N, H, W = 2, 16, 16
    # pred: probabilities in (0,1), shape (N, 1, H, W) like a sigmoid conv head
    pred = jax.nn.sigmoid(jax.random.normal(k1, (N, 1, H, W), jnp.float32))
    # target: binary mask, shape (N, H, W)
    target = (jax.random.uniform(k2, (N, H, W)) > 0.7).astype(jnp.float32)

    ref = _reference(pred, target)

    # Exact-semantics path (arbitrary float targets supported).
    out = focal_loss(pred, target)
    jax.block_until_ready(out)
    assert jnp.allclose(out, ref, rtol=1e-5, atol=1e-6), (out, ref)

    # Binary-target fast path (bf16 target stream + single-log BCE).
    out_fast = focal_loss(pred, target, binary_target=True)
    jax.block_until_ready(out_fast)
    assert jnp.allclose(out_fast, ref, rtol=1e-5, atol=1e-6), (out_fast, ref)

    print("KERNEL_OK")
</pallas_src>

<mosaic_0001>
module attributes {stable_mosaic.version = 11 : i64} {
  func.func @kernel(%arg0: i32, %arg1: i32, %arg2: memref<16x128xf32, #tpu.memory_space<vmem>>, %arg3: memref<16x128xf32, #tpu.memory_space<vmem>>, %arg4: memref<1x8x128xf32, #tpu.memory_space<vmem>>, %arg5: memref<1x8x128xf32, #tpu.memory_space<vmem>>) attributes {dimension_semantics = [#tpu.dimension_semantics<arbitrary>, #tpu.dimension_semantics<arbitrary>], iteration_bounds = array<i64: 1, 1>, scalar_prefetch = 0 : i64, scratch_operands = 0 : i64, tpu.core_type = #tpu.core_type<tc>, window_params = [{transform_indices = @transform_0, window_bounds = array<i64: 16, 128>}, {transform_indices = @transform_1, window_bounds = array<i64: 16, 128>}, {transform_indices = @transform_2, window_bounds = array<i64: 1, 8, 128>}, {transform_indices = @transform_3, window_bounds = array<i64: 1, 8, 128>}]} {
    %c0_i32 = arith.constant 0 : i32
    %0 = arith.cmpi eq, %arg1, %c0_i32 : i32
    %1 = arith.extui %0 : i1 to i32
    %c0_i32_0 = arith.constant 0 : i32
    %2 = arith.cmpi ne, %1, %c0_i32_0 : i32
    scf.if %2 {
      %cst_30 = arith.constant 0.000000e+00 : f32
      %55 = vector.broadcast %cst_30 : f32 to vector<1x8x128xf32>
      %c0_31 = arith.constant 0 : index
      %c0_32 = arith.constant 0 : index
      %c0_33 = arith.constant 0 : index
      %56 = vector.load %arg4[%c0_31, %c0_32, %c0_33] : memref<1x8x128xf32, #tpu.memory_space<vmem>>, vector<1x8x128xf32>
      tpu.vector_store %arg4[%c0_31, %c0_32, %c0_33], %55 {strides = array<i32>} : memref<1x8x128xf32, #tpu.memory_space<vmem>>, vector<1x8x128xf32>,
      %cst_34 = arith.constant 0.000000e+00 : f32
      %57 = vector.broadcast %cst_34 : f32 to vector<1x8x128xf32>
      %c0_35 = arith.constant 0 : index
      %c0_36 = arith.constant 0 : index
      %c0_37 = arith.constant 0 : index
      %58 = vector.load %arg5[%c0_35, %c0_36, %c0_37] : memref<1x8x128xf32, #tpu.memory_space<vmem>>, vector<1x8x128xf32>
      tpu.vector_store %arg5[%c0_35, %c0_36, %c0_37], %57 {strides = array<i32>} : memref<1x8x128xf32, #tpu.memory_space<vmem>>, vector<1x8x128xf32>,
    } else {
    }
    %c0 = arith.constant 0 : index
    %c0_1 = arith.constant 0 : index
    %3 = vector.load %arg2[%c0, %c0_1] : memref<16x128xf32, #tpu.memory_space<vmem>>, vector<16x128xf32>
    %c0_2 = arith.constant 0 : index
    %c0_3 = arith.constant 0 : index
    %4 = vector.load %arg3[%c0_2, %c0_3] : memref<16x128xf32, #tpu.memory_space<vmem>>, vector<16x128xf32>
    %5 = math.log %3 : vector<16x128xf32>
    %cst = arith.constant -1.000000e+02 : f32
    %6 = vector.broadcast %cst : f32 to vector<16x128xf32>
    %7 = arith.maximumf %5, %6 : vector<16x128xf32>
    %cst_4 = arith.constant 1.000000e+00 : f32
    %8 = vector.broadcast %cst_4 : f32 to vector<16x128xf32>
    %9 = arith.subf %8, %3 : vector<16x128xf32>
    %10 = math.log %9 : vector<16x128xf32>
    %cst_5 = arith.constant -1.000000e+02 : f32
    %11 = vector.broadcast %cst_5 : f32 to vector<16x128xf32>
    %12 = arith.maximumf %10, %11 : vector<16x128xf32>
    %13 = arith.mulf %4, %7 : vector<16x128xf32>
    %cst_6 = arith.constant 1.000000e+00 : f32
    %14 = vector.broadcast %cst_6 : f32 to vector<16x128xf32>
    %15 = arith.subf %14, %4 : vector<16x128xf32>
    %16 = arith.mulf %15, %12 : vector<16x128xf32>
    %17 = arith.addf %13, %16 : vector<16x128xf32>
    %cst_7 = arith.constant 0.000000e+00 : f32
    %18 = vector.broadcast %cst_7 : f32 to vector<16x128xf32>
    %19 = arith.subf %18, %17 : vector<16x128xf32>
    %cst_8 = arith.constant 0.000000e+00 : f32
    %20 = vector.broadcast %cst_8 : f32 to vector<16x128xf32>
    %21 = arith.cmpf ogt, %4, %20 : vector<16x128xf32>
    %cst_9 = arith.constant 1.000000e+00 : f32
    %cst_10 = arith.constant 0.000000e+00 : f32
    %22 = vector.broadcast %cst_9 : f32 to vector<16x128xf32>
    %23 = vector.broadcast %cst_10 : f32 to vector<16x128xf32>
    %24 = arith.select %21, %22, %23 : vector<16x128xi1>, vector<16x128xf32>
    %cst_11 = arith.constant 1.000000e+00 : f32
    %25 = vector.broadcast %cst_11 : f32 to vector<16x128xf32>
    %26 = arith.subf %25, %3 : vector<16x128xf32>
    %27 = arith.mulf %26, %26 : vector<16x128xf32>
    %28 = arith.mulf %27, %4 : vector<16x128xf32>
    %29 = arith.mulf %3, %3 : vector<16x128xf32>
    %cst_12 = arith.constant 1.000000e+00 : f32
    %30 = vector.broadcast %cst_12 : f32 to vector<16x128xf32>
    %31 = arith.subf %30, %4 : vector<16x128xf32>
    %32 = arith.mulf %29, %31 : vector<16x128xf32>
    %33 = arith.addf %28, %32 : vector<16x128xf32>
    %cst_13 = arith.constant 2.500000e-01 : f32
    %34 = vector.broadcast %cst_13 : f32 to vector<16x128xf32>
    %35 = arith.mulf %34, %4 : vector<16x128xf32>
    %cst_14 = arith.constant 1.000000e+00 : f32
    %36 = vector.broadcast %cst_14 : f32 to vector<16x128xf32>
    %37 = arith.subf %36, %4 : vector<16x128xf32>
    %cst_15 = arith.constant 7.500000e-01 : f32
    %38 = vector.broadcast %cst_15 : f32 to vector<16x128xf32>
    %39 = arith.mulf %38, %37 : vector<16x128xf32>
    %40 = arith.addf %35, %39 : vector<16x128xf32>
    %41 = arith.mulf %19, %33 : vector<16x128xf32>
    %42 = arith.mulf %41, %40 : vector<16x128xf32>
    %c0_16 = arith.constant 0 : index
    %c0_17 = arith.constant 0 : index
    %c0_18 = arith.constant 0 : index
    %43 = vector.load %arg4[%c0_16, %c0_17, %c0_18] : memref<1x8x128xf32, #tpu.memory_space<vmem>>, vector<1x8x128xf32>
    %44 = vector.shape_cast %42 : vector<16x128xf32> to vector<2x8x128xf32>
    %cst_19 = arith.constant dense<0.000000e+00> : vector<8x128xf32>
    %45 = vector.multi_reduction <add>, %44, %cst_19 [0] : vector<2x8x128xf32> to vector<8x128xf32>
    %46 = vector.shape_cast %45 : vector<8x128xf32> to vector<1x8x128xf32>
    %47 = arith.addf %43, %46 : vector<1x8x128xf32>
    %c0_20 = arith.constant 0 : index
    %c0_21 = arith.constant 0 : index
    %c0_22 = arith.constant 0 : index
    %48 = vector.load %arg4[%c0_20, %c0_21, %c0_22] : memref<1x8x128xf32, #tpu.memory_space<vmem>>, vector<1x8x128xf32>
    tpu.vector_store %arg4[%c0_20, %c0_21, %c0_22], %47 {strides = array<i32>} : memref<1x8x128xf32, #tpu.memory_space<vmem>>, vector<1x8x128xf32>,
    %c0_23 = arith.constant 0 : index
    %c0_24 = arith.constant 0 : index
    %c0_25 = arith.constant 0 : index
    %49 = vector.load %arg5[%c0_23, %c0_24, %c0_25] : memref<1x8x128xf32, #tpu.memory_space<vmem>>, vector<1x8x128xf32>
    %50 = vector.shape_cast %24 : vector<16x128xf32> to vector<2x8x128xf32>
    %cst_26 = arith.constant dense<0.000000e+00> : vector<8x128xf32>
    %51 = vector.multi_reduction <add>, %50, %cst_26 [0] : vector<2x8x128xf32> to vector<8x128xf32>
    %52 = vector.shape_cast %51 : vector<8x128xf32> to vector<1x8x128xf32>
    %53 = arith.addf %49, %52 : vector<1x8x128xf32>
    %c0_27 = arith.constant 0 : index
    %c0_28 = arith.constant 0 : index
    %c0_29 = arith.constant 0 : index
    %54 = vector.load %arg5[%c0_27, %c0_28, %c0_29] : memref<1x8x128xf32, #tpu.memory_space<vmem>>, vector<1x8x128xf32>
    tpu.vector_store %arg5[%c0_27, %c0_28, %c0_29], %53 {strides = array<i32>} : memref<1x8x128xf32, #tpu.memory_space<vmem>>, vector<1x8x128xf32>,
    return
  }
  func.func @transform_0(%arg0: i32, %arg1: i32) -> (i32, i32) {
    %c1_i32 = arith.constant 1 : i32
    %0 = arith.muli %arg0, %c1_i32 : i32
    %1 = arith.addi %0, %arg1 : i32
    %c0_i32 = arith.constant 0 : i32
    %c0_i32_0 = arith.constant 0 : i32
    return %1, %c0_i32 : i32, i32
  }
  func.func @transform_1(%arg0: i32, %arg1: i32) -> (i32, i32) {
    %c1_i32 = arith.constant 1 : i32
    %0 = arith.muli %arg0, %c1_i32 : i32
    %1 = arith.addi %0, %arg1 : i32
    %c0_i32 = arith.constant 0 : i32
    %c0_i32_0 = arith.constant 0 : i32
    return %1, %c0_i32 : i32, i32
  }
  func.func @transform_2(%arg0: i32, %arg1: i32) -> (i32, i32, i32) {
    %c0_i32 = arith.constant 0 : i32
    %c0_i32_0 = arith.constant 0 : i32
    %c0_i32_1 = arith.constant 0 : i32
    return %arg0, %c0_i32, %c0_i32_0 : i32, i32, i32
  }
  func.func @transform_3(%arg0: i32, %arg1: i32) -> (i32, i32, i32) {
    %c0_i32 = arith.constant 0 : i32
    %c0_i32_0 = arith.constant 0 : i32
    %c0_i32_1 = arith.constant 0 : i32
    return %arg0, %c0_i32, %c0_i32_0 : i32, i32, i32
  }
}

</mosaic_0001>

<llo_original>
// kernel: tpu_custom_call.1
$region0: #{tpu_custom_call.1}
  #allocation0 [shape = 'u32[]', space=smem, size = 0x4, offset = 0x4, fixed_abs, tag = 'smem constant byte address 0x4 - core index']
  #allocation1 [shape = 'u32[144,128]{1,0:T(1,128)}', space=vmem, size = 0x12000, scoped, tag = 'internal scratch']
  %s0 = inlined_call_operand.hbm [shape: f32[16,128], index: 0, kind: input, shape index: {}]
  %s1 = inlined_call_operand.hbm [shape: f32[16,128], index: 1, kind: input, shape index: {}]
  %s2 = inlined_call_operand.hbm [shape: f32[1,8,128], index: 2, kind: output, shape index: {0}]
  %s3 = inlined_call_operand.hbm [shape: f32[1,8,128], index: 3, kind: output, shape index: {1}]
  %4 = xla_tuple %s2, %s3
  %s5 = sld [smem:[#allocation0]]
  $region38: #{tpu_custom_call.1} parent=0
    _
  %s7 = ssub.s32 1, %s5
  %s8 = scalar_select 0, %s7, %s5
  $region1: #{tpu_custom_call.1} parent=0
    #allocation2 [shape = 'u8[8192]{0}', space=vmem, size = 0x2000, scoped, tag = 'input window, operand 0, single buffered']
    #allocation3 [shape = 's32[1]{0}', space=sflag, size = 0x4, scoped, tag = 'scoped memory for tpu_custom_call.1']
    #allocation4 [shape = 's32[1]{0}', space=sflag, size = 0x4, scoped, tag = 'scoped memory for tpu_custom_call.1']
    #allocation5 [shape = 'u8[8192]{0}', space=vmem, size = 0x2000, scoped, tag = 'input window, operand 1, single buffered']
    #allocation6 [shape = 's32[1]{0}', space=sflag, size = 0x4, scoped, tag = 'scoped memory for tpu_custom_call.1']
    #allocation7 [shape = 'u8[4096]{0}', space=vmem, size = 0x1000, scoped, tag = 'output window, operand 0, single buffered']
    #allocation8 [shape = 'u8[4096]{0}', space=vmem, size = 0x1000, scoped, tag = 'output window, operand 1, single buffered']
    #allocation9 [shape = 's32[1]{0}', space=sflag, size = 0x4, scoped, tag = 'scoped memory for tpu_custom_call.1']
    %9 = vsyncpa [#allocation3], 0
    %10 = vsyncpa [#allocation6], 0
    %11 = vsyncpa [#allocation4], 0
    %12 = vsyncpa [#allocation9], 0
    // Predicated region
    $region2: #{tpu_custom_call.1} parent=1 // pred_check
      _
    $region3: #{tpu_custom_call.1} parent=1 // pred_check_branch
      %14 = sbr.rel (0) target = $region5
    $region4: #{tpu_custom_call.1} parent=1 // pred_region
      %s15 = sadd.s32 0, 0
      %s16 = smul.u32 2, %s15
      %s18 = ssub.s32 256, 256
      %19 = vsyncadd [#allocation3], %s18
      %s20 = smul.addr %s16, 128
      %s21 = scalar_lea.hbm %s0, %s20
      %s22 = sshll.u32 [#allocation2], 4
      %s23 = int_to_ptr.vmem [resolvable:$true] %s22
      %28 = dma.hbm_to_vmem [thread:$0]  %s21, 256, %s23, [#allocation3], 128, 128, 8
    $region5: #{tpu_custom_call.1} parent=1 // pred_fallthru
      _
    // Predicated region
    $region6: #{tpu_custom_call.1} parent=1 // pred_check
      _
    $region7: #{tpu_custom_call.1} parent=1 // pred_check_branch
      %30 = sbr.rel (0) target = $region9
    $region8: #{tpu_custom_call.1} parent=1 // pred_region
      %s31 = sadd.s32 0, 0
      %s32 = smul.u32 2, %s31
      %s34 = ssub.s32 256, 256
      %35 = vsyncadd [#allocation6], %s34
      %s36 = smul.addr %s32, 128
      %s37 = scalar_lea.hbm %s1, %s36
      %s38 = sshll.u32 [#allocation5], 4
      %s39 = int_to_ptr.vmem [resolvable:$true] %s38
      %44 = dma.hbm_to_vmem [thread:$0]  %s37, 256, %s39, [#allocation6], 128, 128, 8
    $region9: #{tpu_custom_call.1} parent=1 // pred_fallthru
      _
    // Predicated region
    $region10: #{tpu_custom_call.1} parent=1 // pred_check
      _
    $region11: #{tpu_custom_call.1} parent=1 // pred_check_branch
      %46 = sbr.rel (0) target = $region13
    $region12: #{tpu_custom_call.1} parent=1 // pred_region
      %47 = dma.done [#allocation3], 256
    $region13: #{tpu_custom_call.1} parent=1 // pred_fallthru
      _
    // Predicated region
    $region14: #{tpu_custom_call.1} parent=1 // pred_check
      _
    $region15: #{tpu_custom_call.1} parent=1 // pred_check_branch
      %49 = sbr.rel (0) target = $region17
    $region16: #{tpu_custom_call.1} parent=1 // pred_region
      %50 = dma.done [#allocation6], 256
    $region17: #{tpu_custom_call.1} parent=1 // pred_fallthru
      _
    %s51 = sadd.s32 0, 0
    %s52 = smul.u32 2, %s51
    %s53 = sadd.s32 0, 0
    %s54 = smul.u32 2, %s53
    %p55 = scmp.eq.s32.totalorder 0, 0
    // Predicated region
    $region18: #{tpu_custom_call.1} parent=1 // pred_check
      %p56 = pneg %p55
    $region19: #{tpu_custom_call.1} parent=1 // pred_check_branch
      %58 = sbr.rel (%p56) target = $region21
    $region20: #{tpu_custom_call.1} parent=1 // pred_region
      %59 = vst [vmem:[#allocation7] sm:$0xff] 0.0
      %60 = vst [vmem:[#allocation8] sm:$0xff] 0.0
    $region21: #{tpu_custom_call.1} parent=1 // pred_fallthru
      _
    %v61 = vld [vmem:[#allocation2] sm:$0xff]
    %v62 = vld [vmem:[#allocation2 + $0x8] sm:$0xff]
    %v63 = vld [vmem:[#allocation5] sm:$0xff]
    %v64 = vld [vmem:[#allocation5 + $0x8] sm:$0xff]
    %v65 = vlog2.pop %v61
    %v66 = vmul.f32 %v65, 0.6931472
    %v67 = vlog2.pop %v62
    %v68 = vmul.f32 %v67, 0.6931472
    %v69 = vmax.f32 %v66, -100.0
    %v70 = vmax.f32 %v68, -100.0
    %v71 = vsub.f32 1.0, %v61
    %v72 = vsub.f32 1.0, %v62
    %v73 = vlog2.pop %v71
    %v74 = vmul.f32 %v73, 0.6931472
    %v75 = vlog2.pop %v72
    %v76 = vmul.f32 %v75, 0.6931472
    %v77 = vmax.f32 %v74, -100.0
    %v78 = vmax.f32 %v76, -100.0
    %v79 = vmul.f32 %v63, %v69
    %v80 = vmul.f32 %v64, %v70
    %v81 = vsub.f32 1.0, %v63
    %v82 = vsub.f32 1.0, %v64
    %v83 = vmul.f32 %v81, %v77
    %v84 = vmul.f32 %v82, %v78
    %v85 = vadd.f32 %v79, %v83
    %v86 = vadd.f32 %v80, %v84
    %v87 = vsub.f32 0.0, %v85
    %v88 = vsub.f32 0.0, %v86
    %vm89 = vcmp.gt.f32.partialorder %v63, 0.0
    %vm90 = vcmp.gt.f32.partialorder %v64, 0.0
    %v91 = vsel %vm89, 1.0, 0.0
    %v92 = vsel %vm90, 1.0, 0.0
    %v93 = vmul.f32 %v71, %v71
    %v94 = vmul.f32 %v72, %v72
    %v95 = vmul.f32 %v93, %v63
    %v96 = vmul.f32 %v94, %v64
    %v97 = vmul.f32 %v61, %v61
    %v98 = vmul.f32 %v62, %v62
    %v99 = vmul.f32 %v97, %v81
    %v100 = vmul.f32 %v98, %v82
    %v101 = vadd.f32 %v95, %v99
    %v102 = vadd.f32 %v96, %v100
    %v103 = vmul.f32 %v63, 0.25
    %v104 = vmul.f32 %v64, 0.25
    %v105 = vmul.f32 %v81, 0.75
    %v106 = vmul.f32 %v82, 0.75
    %v107 = vadd.f32 %v103, %v105
    %v108 = vadd.f32 %v104, %v106
    %v109 = vmul.f32 %v87, %v101
    %v110 = vmul.f32 %v88, %v102
    %v111 = vmul.f32 %v109, %v107
    %v112 = vmul.f32 %v110, %v108
    %v113 = vld [vmem:[#allocation7] sm:$0xff]
    %v114 = vadd.f32 %v111, %v112
    %v115 = vadd.f32 %v113, %v114
    %116 = vst [vmem:[#allocation7] sm:$0xff] %v115
    %v117 = vld [vmem:[#allocation8] sm:$0xff]
    %v118 = vadd.f32 %v91, %v92
    %v119 = vadd.f32 %v117, %v118
    %120 = vst [vmem:[#allocation8] sm:$0xff] %v119
    // Predicated region
    $region22: #{tpu_custom_call.1} parent=1 // pred_check
      _
    $region23: #{tpu_custom_call.1} parent=1 // pred_check_branch
      %122 = sbr.rel (0) target = $region25
    $region24: #{tpu_custom_call.1} parent=1 // pred_region
      %s124 = ssub.s32 128, 128
      %125 = vsyncadd [#allocation4], %s124
      %s127 = sshll.u32 [#allocation7], 4
      %s128 = int_to_ptr.vmem [resolvable:$true] %s127
      %130 = dma.vmem_to_hbm [thread:$0]  %s128, 128, %s2, [#allocation4]
    $region25: #{tpu_custom_call.1} parent=1 // pred_fallthru
      _
    // Predicated region
    $region26: #{tpu_custom_call.1} parent=1 // pred_check
      _
    $region27: #{tpu_custom_call.1} parent=1 // pred_check_branch
      %132 = sbr.rel (0) target = $region29
    $region28: #{tpu_custom_call.1} parent=1 // pred_region
      %s134 = ssub.s32 128, 128
      %135 = vsyncadd [#allocation9], %s134
      %s137 = sshll.u32 [#allocation8], 4
      %s138 = int_to_ptr.vmem [resolvable:$true] %s137
      %140 = dma.vmem_to_hbm [thread:$0]  %s138, 128, %s3, [#allocation9]
    $region29: #{tpu_custom_call.1} parent=1 // pred_fallthru
      _
    // Predicated region
    $region30: #{tpu_custom_call.1} parent=1 // pred_check
      _
    $region31: #{tpu_custom_call.1} parent=1 // pred_check_branch
      %142 = sbr.rel (0) target = $region33
    $region32: #{tpu_custom_call.1} parent=1 // pred_region
      %143 = dma.done [#allocation4], 128
    $region33: #{tpu_custom_call.1} parent=1 // pred_fallthru
      _
    // Predicated region
    $region34: #{tpu_custom_call.1} parent=1 // pred_check
      _
    $region35: #{tpu_custom_call.1} parent=1 // pred_check_branch
      %145 = sbr.rel (0) target = $region37
    $region36: #{tpu_custom_call.1} parent=1 // pred_region
      %146 = dma.done [#allocation9], 128
    $region37: #{tpu_custom_call.1} parent=1 // pred_fallthru
      _
    %147 = vsyncpa [#allocation3], 1
    %148 = vsyncpa [#allocation6], 1
    %149 = vsyncpa [#allocation4], 1
    %150 = vsyncpa [#allocation9], 1

</llo_original>
